<compile_context>
chip_gen: v7x
topology: tpu7x:2x2x1
jax: 0.10.0
libtpu: 0.0.40
codegen_flags: <defaults>
</compile_context>

<pallas_src>
import functools
import math

import jax
import jax.numpy as jnp
import numpy as np
from jax.experimental import pallas as pl
from jax.experimental.pallas import tpu as pltpu


# ----------------------------------------------------------------------------
# One-time pltpu.roll direction probe (lane axis and sublane axis)
# ----------------------------------------------------------------------------
@functools.lru_cache(maxsize=None)
def _roll_conventions():
    """Returns (lane_jnp_like, sublane_jnp_like).

    "jnp-like" means pltpu.roll(x, s, ax) == jnp.roll(x, s, ax), i.e.
    out[i] = in[(i - s) mod n].
    """
    def kern(x_ref, lane_ref, sub_ref):
        lane_ref[...] = pltpu.roll(x_ref[...], 1, 1)
        sub_ref[...] = pltpu.roll(x_ref[...], 1, 0)

    col = jnp.arange(128, dtype=jnp.float32)[None, :]
    row = jnp.arange(8, dtype=jnp.float32)[:, None]
    x = row * 1000.0 + jnp.broadcast_to(col, (8, 128))
    lane, sub = pl.pallas_call(
        kern,
        out_shape=(jax.ShapeDtypeStruct((8, 128), jnp.float32),
                   jax.ShapeDtypeStruct((8, 128), jnp.float32)),
        in_specs=[pl.BlockSpec(memory_space=pltpu.MemorySpace.VMEM)],
        out_specs=(pl.BlockSpec(memory_space=pltpu.MemorySpace.VMEM),
                   pl.BlockSpec(memory_space=pltpu.MemorySpace.VMEM)),
    )(x)
    lane_v = float(lane[0, 0]) % 1000.0   # column index that landed at [0, 0]
    sub_v = float(sub[0, 0]) // 1000.0    # row index that landed at [0, 0]
    if lane_v not in (127.0, 1.0) or sub_v not in (7.0, 1.0):
        raise RuntimeError(f"unrecognized pltpu.roll convention ({lane_v}, {sub_v})")
    return (lane_v == 127.0), (sub_v == 7.0)


@functools.lru_cache(maxsize=None)
def _skew_roll_bits(seq_len, lane_jnp_like):
    """Per-row lane-rotation amounts (binary-decomposed) so that, after the
    in-kernel barrel shifter, srel1[q, c] = qer[q, (c - (q+1)) mod S]  —
    i.e. each row q is rotated RIGHT by (q+1), the causal part of torch skew."""
    rows = np.arange(seq_len)
    right = (rows + 1) % seq_len
    amount = right if lane_jnp_like else (seq_len - right) % seq_len
    nbits = max(1, int(seq_len - 1).bit_length())
    bits = ((amount[:, None] >> np.arange(nbits)[None, :]) & 1).astype(np.int32)
    return jnp.asarray(bits)  # (S, nbits), values in {0, 1}


# ----------------------------------------------------------------------------
# Fully fused per-batch MHA kernel
# ----------------------------------------------------------------------------
def _fused_mha_kernel(num_heads, depth, scale, nbits, up_shift,
                      qin_ref, kin_ref, vin_ref,
                      wq_ref, bq_ref, wk_ref, bk_ref, wv_ref, bv_ref,
                      wo_ref, bo_ref, er_ref, bits_ref, mask_ref,
                      out_ref, attw_ref, q_ref, k_ref, v_ref,
                      attn_buf):
    S = qin_ref.shape[0]

    # ---- Q/K/V projections (full-width K = d_model MXU matmuls) ------------
    q = jnp.dot(qin_ref[...], wq_ref[...], preferred_element_type=jnp.float32) + bq_ref[...]
    k = jnp.dot(kin_ref[...], wk_ref[...], preferred_element_type=jnp.float32) + bk_ref[...]
    v = jnp.dot(vin_ref[...], wv_ref[...], preferred_element_type=jnp.float32) + bv_ref[...]
    q_ref[...] = q          # module outputs Q, K, V (lane-dense (S, d_model) writes)
    k_ref[...] = k
    v_ref[...] = v

    # ---- head-invariant values (hoisted out of the head loop) --------------
    er = er_ref[...]                       # (S, depth)
    neg_mask = mask_ref[...]               # (S, S), already * -1e9
    bits = bits_ref[...]                   # (S, nbits)
    takes = [bits[:, b:b + 1] == 1 for b in range(nbits)]
    row_idx = jax.lax.broadcasted_iota(jnp.int32, (S, S), 0)
    col_idx = jax.lax.broadcasted_iota(jnp.int32, (S, S), 1)
    causal_part = col_idx <= row_idx       # skew rows come from query row q
    zero_diag = col_idx == row_idx + 1     # torch skew's zero-pad element

    for h in range(num_heads):
        lo = h * depth
        qh = q[:, lo:lo + depth] * scale   # fold 1/sqrt(depth) into q (scales QK^T and Srel)
        kh = k[:, lo:lo + depth]
        vh = v[:, lo:lo + depth]

        # QK^T and QEr^T on the MXU (both already scaled via qh)
        logits = jax.lax.dot_general(qh, kh, (((1,), (1,)), ((), ())),
                                     preferred_element_type=jnp.float32)
        qer = jax.lax.dot_general(qh, er, (((1,), (1,)), ((), ())),
                                  preferred_element_type=jnp.float32)

        # Exact Music-Transformer skew:
        #   srel1[q, c] = qer[q, (c - (q+1)) mod S]   (barrel shifter, XLU rolls)
        #   srel2[q, c] = srel1[q+1, c]               (one sublane roll)
        #   srel[q, c]  = srel1 if c<=q ; 0 if c==q+1 ; srel2 otherwise
        srel1 = qer
        for b in range(nbits):
            rolled = pltpu.roll(srel1, 1 << b, 1)
            srel1 = jnp.where(takes[b], rolled, srel1)
        srel2 = pltpu.roll(srel1, up_shift, 0)
        srel = jnp.where(causal_part, srel1, jnp.where(zero_diag, 0.0, srel2))

        logits = logits + srel + neg_mask
        mx = jnp.max(logits, axis=-1, keepdims=True)
        e = jnp.exp(logits - mx)
        denom = jnp.sum(e, axis=-1, keepdims=True)
        w = e * pl.reciprocal(denom, approx=False)

        attw_ref[h] = w
        attn_buf[:, lo:lo + depth] = jnp.dot(w, vh, preferred_element_type=jnp.float32)

    # ---- fused output projection (lane-dense (S, d_model) HBM write) -------
    out_ref[...] = (jnp.dot(attn_buf[...], wo_ref[...],
                            preferred_element_type=jnp.float32) + bo_ref[...])


def pallas_fused_mha(Q, K, V, neg_mask, p, er_s, skew_bits, num_heads, up_shift):
    B, S, d_model = Q.shape
    depth = d_model // num_heads
    nbits = skew_bits.shape[1]
    kernel = functools.partial(_fused_mha_kernel, num_heads, depth,
                               1.0 / math.sqrt(depth), nbits, up_shift)

    bsd = pl.BlockSpec((None, S, d_model), lambda b: (b, 0, 0))
    wspec = pl.BlockSpec((d_model, d_model), lambda b: (0, 0))
    bspec = pl.BlockSpec((1, d_model), lambda b: (0, 0))

    return pl.pallas_call(
        kernel,
        grid=(B,),
        out_shape=(jax.ShapeDtypeStruct((B, S, d_model), jnp.float32),
                   jax.ShapeDtypeStruct((B, num_heads, S, S), jnp.float32),
                   jax.ShapeDtypeStruct((B, S, d_model), jnp.float32),
                   jax.ShapeDtypeStruct((B, S, d_model), jnp.float32),
                   jax.ShapeDtypeStruct((B, S, d_model), jnp.float32)),
        in_specs=[bsd, bsd, bsd,
                  wspec, bspec, wspec, bspec, wspec, bspec, wspec, bspec,
                  pl.BlockSpec((S, depth), lambda b: (0, 0)),
                  pl.BlockSpec((S, nbits), lambda b: (0, 0)),
                  pl.BlockSpec((None, None, S, S), lambda b: (b, 0, 0, 0))],
        out_specs=(bsd,
                   pl.BlockSpec((None, num_heads, S, S), lambda b: (b, 0, 0, 0)),
                   bsd, bsd, bsd),
        scratch_shapes=[pltpu.VMEM((S, d_model), jnp.float32)],
        compiler_params=pltpu.CompilerParams(dimension_semantics=("parallel",)),
    )(Q, K, V,
      p["wq_t"], p["bq"], p["wk_t"], p["bk"], p["wv_t"], p["bv"],
      p["wo_t"], p["bo"], er_s, skew_bits, neg_mask)


# ----------------------------------------------------------------------------
# Wrapper (parameter prep done once; forward keeps the module semantics)
# ----------------------------------------------------------------------------
def prepare_params(raw):
    """Pre-transpose nn.Linear weights to (in, out) once; reshape biases to (1, N)."""
    return {
        "wq_t": raw["wq"].T, "bq": raw["bq"].reshape(1, -1),
        "wk_t": raw["wk"].T, "bk": raw["bk"].reshape(1, -1),
        "wv_t": raw["wv"].T, "bv": raw["bv"].reshape(1, -1),
        "wo_t": raw["wo"].T, "bo": raw["bo"].reshape(1, -1),
        "Er": raw["Er"],
    }


def custom_mha_forward(p, Q, K, V, mask, num_heads):
    """mask is (B, 1, S, S) (or broadcastable) with 1.0 = masked (matches `mask * -1e9`)."""
    B, S, d_model = Q.shape
    er_s = p["Er"][:S, :]                                       # (S, depth)
    lane_jnp, sub_jnp = _roll_conventions()
    skew_bits = _skew_roll_bits(S, lane_jnp)
    up_shift = (S - 1) if sub_jnp else 1
    neg_mask = jnp.broadcast_to(mask.astype(jnp.float32) * (-1e9), (B, 1, S, S))

    out, attw, q, k, v = pallas_fused_mha(Q, K, V, neg_mask, p, er_s,
                                          skew_bits, num_heads, up_shift)
    return {"output": out, "attention_weights": attw, "Q": q, "K": k, "V": v}


# ----------------------------------------------------------------------------
# Pure-JAX reference (mirrors the PyTorch forward exactly) for validation
# ----------------------------------------------------------------------------
def skew_ref(QEr):
    B, H, S, _ = QEr.shape
    zero_pad = jnp.zeros((B, H, S, 1), QEr.dtype)
    padded = jnp.concatenate([zero_pad, QEr], axis=-1)   # (B,H,S,S+1)
    reshaped = padded.reshape(B, H, S + 1, S)
    return reshaped[:, :, 1:]                            # (B,H,S,S)


def reference_forward(params, Q, K, V, mask, num_heads):
    B, S, d_model = Q.shape
    depth = d_model // num_heads
    q = (Q.reshape(B * S, d_model) @ params["wq"].T + params["bq"]).reshape(B, S, d_model)
    k = (K.reshape(B * S, d_model) @ params["wk"].T + params["bk"]).reshape(B, S, d_model)
    v = (V.reshape(B * S, d_model) @ params["wv"].T + params["bv"]).reshape(B, S, d_model)

    def split_heads(x):
        return x.reshape(B, S, num_heads, depth).transpose(0, 2, 1, 3)

    q_s, k_s, v_s = split_heads(q), split_heads(k), split_heads(v)
    Er_s = params["Er"][:S, :]
    qer = jnp.einsum("bhsd,td->bhst", q_s, Er_s)
    srel = skew_ref(qer)

    logits = jnp.einsum("bhqd,bhkd->bhqk", q_s, k_s) + srel
    logits = logits / math.sqrt(depth)
    logits = logits + mask * (-1e9)
    attw = jax.nn.softmax(logits, axis=-1)
    out = jnp.einsum("bhqk,bhkd->bhqd", attw, v_s)
    out = out.transpose(0, 2, 1, 3).reshape(B * S, d_model)
    out = out @ params["wo"].T + params["bo"]
    return {"output": out.reshape(B, S, d_model), "attention_weights": attw,
            "Q": q, "K": k, "V": v}


# ----------------------------------------------------------------------------
# Main
# ----------------------------------------------------------------------------
if __name__ == "__main__":
    # Small but TPU-tile-aligned shapes (lane dims multiples of 128).
    B, S, d_model, num_heads, max_len = 2, 128, 128, 4, 256
    depth = d_model // num_heads

    key = jax.random.PRNGKey(0)
    ks = jax.random.split(key, 12)

    params = {
        "wq": 0.05 * jax.random.normal(ks[0], (d_model, d_model), jnp.float32),
        "bq": 0.01 * jax.random.normal(ks[1], (d_model,), jnp.float32),
        "wk": 0.05 * jax.random.normal(ks[2], (d_model, d_model), jnp.float32),
        "bk": 0.01 * jax.random.normal(ks[3], (d_model,), jnp.float32),
        "wv": 0.05 * jax.random.normal(ks[4], (d_model, d_model), jnp.float32),
        "bv": 0.01 * jax.random.normal(ks[5], (d_model,), jnp.float32),
        "wo": 0.05 * jax.random.normal(ks[6], (d_model, d_model), jnp.float32),
        "bo": 0.01 * jax.random.normal(ks[7], (d_model,), jnp.float32),
        "Er": jax.random.normal(ks[8], (max_len, depth), jnp.float32),
    }

    Q = jax.random.normal(ks[9], (B, S, d_model), jnp.float32)
    K = jax.random.normal(ks[10], (B, S, d_model), jnp.float32)
    V = jax.random.normal(ks[11], (B, S, d_model), jnp.float32)

    # causal mask (1.0 = masked) and a no-op mask (exercises the exact skew everywhere)
    causal = jnp.triu(jnp.ones((S, S), jnp.float32), k=1)[None, None, :, :]
    causal = jnp.broadcast_to(causal, (B, 1, S, S))
    no_mask = jnp.zeros((B, 1, S, S), jnp.float32)

    prepped = prepare_params(params)
    for mask in (causal, no_mask):
        out = custom_mha_forward(prepped, Q, K, V, mask, num_heads)
        jax.block_until_ready(out)
        ref = reference_forward(params, Q, K, V, mask, num_heads)
        for name in ("output", "attention_weights", "Q", "K", "V"):
            np.testing.assert_allclose(np.asarray(out[name]), np.asarray(ref[name]),
                                       rtol=1e-3, atol=1e-3)

    print("KERNEL_OK")
</pallas_src>

<mosaic_0001>
module attributes {stable_mosaic.version = 11 : i64} {
  func.func @kern(%arg0: memref<8x128xf32, #tpu.memory_space<vmem>>, %arg1: memref<8x128xf32, #tpu.memory_space<vmem>>, %arg2: memref<8x128xf32, #tpu.memory_space<vmem>>) attributes {dimension_semantics = [], scalar_prefetch = 0 : i64, scratch_operands = 0 : i64, tpu.core_type = #tpu.core_type<tc>} {
    %c0 = arith.constant 0 : index
    %c0_0 = arith.constant 0 : index
    %0 = vector.load %arg0[%c0, %c0_0] : memref<8x128xf32, #tpu.memory_space<vmem>>, vector<8x128xf32>
    %c1_i32 = arith.constant 1 : i32
    %1 = tpu.dynamic_rotate %0 by %c1_i32 dim 1 : vector<8x128xf32>, i32 -> vector<8x128xf32>
    %c0_1 = arith.constant 0 : index
    %c0_2 = arith.constant 0 : index
    %2 = vector.load %arg1[%c0_1, %c0_2] : memref<8x128xf32, #tpu.memory_space<vmem>>, vector<8x128xf32>
    tpu.vector_store %arg1[%c0_1, %c0_2], %1 {strides = array<i32>} : memref<8x128xf32, #tpu.memory_space<vmem>>, vector<8x128xf32>,
    %c0_3 = arith.constant 0 : index
    %c0_4 = arith.constant 0 : index
    %3 = vector.load %arg0[%c0_3, %c0_4] : memref<8x128xf32, #tpu.memory_space<vmem>>, vector<8x128xf32>
    %c1_i32_5 = arith.constant 1 : i32
    %4 = tpu.dynamic_rotate %3 by %c1_i32_5 dim 0 : vector<8x128xf32>, i32 -> vector<8x128xf32>
    %c0_6 = arith.constant 0 : index
    %c0_7 = arith.constant 0 : index
    %5 = vector.load %arg2[%c0_6, %c0_7] : memref<8x128xf32, #tpu.memory_space<vmem>>, vector<8x128xf32>
    tpu.vector_store %arg2[%c0_6, %c0_7], %4 {strides = array<i32>} : memref<8x128xf32, #tpu.memory_space<vmem>>, vector<8x128xf32>,
    return
  }
}

</mosaic_0001>

<llo_original>
// kernel: tpu_custom_call.1
$region0: #{tpu_custom_call.1}
  #allocation0 [shape = 'u32[]', space=smem, size = 0x4, offset = 0x4, fixed_abs, tag = 'smem constant byte address 0x4 - core index']
  #allocation1 [shape = 'u32[144,128]{1,0:T(1,128)}', space=vmem, size = 0x12000, scoped, tag = 'internal scratch']
  %s0 = inlined_call_operand.hbm [shape: f32[8,128], index: 0, kind: input, shape index: {}]
  %s1 = inlined_call_operand.hbm [shape: f32[8,128], index: 1, kind: output, shape index: {0}]
  %s2 = inlined_call_operand.hbm [shape: f32[8,128], index: 2, kind: output, shape index: {1}]
  %3 = xla_tuple %s1, %s2
  %s4 = sld [smem:[#allocation0]]
  $region26: #{tpu_custom_call.1} parent=0
    _
  %s6 = ssub.s32 1, %s4
  %s7 = scalar_select 0, %s6, %s4
  $region1: #{tpu_custom_call.1} parent=0
    #allocation2 [shape = 'u8[4096]{0}', space=vmem, size = 0x1000, scoped, tag = 'input window, operand 0, single buffered']
    #allocation3 [shape = 's32[1]{0}', space=sflag, size = 0x4, scoped, tag = 'scoped memory for tpu_custom_call.1']
    #allocation4 [shape = 's32[1]{0}', space=sflag, size = 0x4, scoped, tag = 'scoped memory for tpu_custom_call.1']
    #allocation5 [shape = 'u8[4096]{0}', space=vmem, size = 0x1000, scoped, tag = 'output window, operand 0, single buffered']
    #allocation6 [shape = 'u8[4096]{0}', space=vmem, size = 0x1000, scoped, tag = 'output window, operand 1, single buffered']
    #allocation7 [shape = 's32[1]{0}', space=sflag, size = 0x4, scoped, tag = 'scoped memory for tpu_custom_call.1']
    %8 = vsyncpa [#allocation3], 0
    %9 = vsyncpa [#allocation4], 0
    %10 = vsyncpa [#allocation7], 0
    // Predicated region
    $region2: #{tpu_custom_call.1} parent=1 // pred_check
      _
    $region3: #{tpu_custom_call.1} parent=1 // pred_check_branch
      %12 = sbr.rel (0) target = $region5
    $region4: #{tpu_custom_call.1} parent=1 // pred_region
      %s14 = ssub.s32 128, 128
      %15 = vsyncadd [#allocation3], %s14
      %s17 = sshll.u32 [#allocation2], 4
      %s18 = int_to_ptr.vmem [resolvable:$true] %s17
      %20 = dma.hbm_to_vmem [thread:$0]  %s0, 128, %s18, [#allocation3]
    $region5: #{tpu_custom_call.1} parent=1 // pred_fallthru
      _
    // Predicated region
    $region6: #{tpu_custom_call.1} parent=1 // pred_check
      _
    $region7: #{tpu_custom_call.1} parent=1 // pred_check_branch
      %22 = sbr.rel (0) target = $region9
    $region8: #{tpu_custom_call.1} parent=1 // pred_region
      %23 = dma.done [#allocation3], 128
    $region9: #{tpu_custom_call.1} parent=1 // pred_fallthru
      _
    %v24 = vld [vmem:[#allocation2] sm:$0xff]
    %25 = vrot.lane.b32.xlu0 %v24, 1
    %v26 = vpop.permute.xlu0 %25
    %27 = vst [vmem:[#allocation5] sm:$0xff] %v26
    %v28 = vld [vmem:[#allocation2] sm:$0xff]
    %v29 = vrot.slane %v28, 7
    %30 = vst [vmem:[#allocation6] sm:$0xff] %v29
    // Predicated region
    $region10: #{tpu_custom_call.1} parent=1 // pred_check
      _
    $region11: #{tpu_custom_call.1} parent=1 // pred_check_branch
      %32 = sbr.rel (0) target = $region13
    $region12: #{tpu_custom_call.1} parent=1 // pred_region
      %s34 = ssub.s32 128, 128
      %35 = vsyncadd [#allocation4], %s34
      %s37 = sshll.u32 [#allocation5], 4
      %s38 = int_to_ptr.vmem [resolvable:$true] %s37
      %40 = dma.vmem_to_hbm [thread:$0]  %s38, 128, %s1, [#allocation4]
    $region13: #{tpu_custom_call.1} parent=1 // pred_fallthru
      _
    // Predicated region
    $region14: #{tpu_custom_call.1} parent=1 // pred_check
      _
    $region15: #{tpu_custom_call.1} parent=1 // pred_check_branch
      %42 = sbr.rel (0) target = $region17
    $region16: #{tpu_custom_call.1} parent=1 // pred_region
      %s44 = ssub.s32 128, 128
      %45 = vsyncadd [#allocation7], %s44
      %s47 = sshll.u32 [#allocation6], 4
      %s48 = int_to_ptr.vmem [resolvable:$true] %s47
      %50 = dma.vmem_to_hbm [thread:$0]  %s48, 128, %s2, [#allocation7]
    $region17: #{tpu_custom_call.1} parent=1 // pred_fallthru
      _
    // Predicated region
    $region18: #{tpu_custom_call.1} parent=1 // pred_check
      _
    $region19: #{tpu_custom_call.1} parent=1 // pred_check_branch
      %52 = sbr.rel (0) target = $region21
    $region20: #{tpu_custom_call.1} parent=1 // pred_region
      %53 = dma.done [#allocation4], 128
    $region21: #{tpu_custom_call.1} parent=1 // pred_fallthru
      _
    // Predicated region
    $region22: #{tpu_custom_call.1} parent=1 // pred_check
      _
    $region23: #{tpu_custom_call.1} parent=1 // pred_check_branch
      %55 = sbr.rel (0) target = $region25
    $region24: #{tpu_custom_call.1} parent=1 // pred_region
      %56 = dma.done [#allocation7], 128
    $region25: #{tpu_custom_call.1} parent=1 // pred_fallthru
      _
    %57 = vsyncpa [#allocation3], 1
    %58 = vsyncpa [#allocation4], 1
    %59 = vsyncpa [#allocation7], 1

</llo_original>
